<compile_context>
chip_gen: v6e
topology: v6e:2x2x1
jax: 0.10.0
libtpu: 0.0.40
codegen_flags: <defaults>
</compile_context>

<pallas_src>
import math

import jax
import jax.numpy as jnp
from jax import lax
from jax.experimental import pallas as pl
from jax.experimental.pallas import tpu as pltpu

NEG_INF = -1e30                      # finite masked value -> no exp(-inf - -inf) NaN
VMEM_LIMIT = 48 * 1024 * 1024


def _tile(n, pref, mult=8):
    """Largest tile <= pref that divides n and is a multiple of `mult`.
    Returns n (full extent) when n <= pref; raises instead of silently falling
    back to a VMEM-blowing full-extent tile for large odd n."""
    if n <= pref:
        return n
    for t in range(pref, mult - 1, -1):
        if n % t == 0 and t % mult == 0:
            return t
    raise ValueError(f"no tile <= {pref} (multiple of {mult}) divides {n}; pad the input")


# ---------------- kernel 1: fused QKV projection + RoPE ----------------
def _make_proj_kernel(head_dim, heads_per_block):
    half = head_dim // 2

    def kernel(x_ref, wq_ref, wk_ref, wv_ref, cos_ref, sin_ref,
               q_ref, k_ref, v_ref):
        x = x_ref[0]                                       # (tr, dim) bf16
        cos = cos_ref[...]                                 # (tr, hd) f32
        sin = sin_ref[...]                                 # sign-folded sin, f32
        q = jnp.dot(x, wq_ref[...], preferred_element_type=jnp.float32)   # (tr, hpb*hd)
        k = jnp.dot(x, wk_ref[...], preferred_element_type=jnp.float32)
        v = jnp.dot(x, wv_ref[...], preferred_element_type=jnp.float32)

        def rope(t):                                       # per-head rotate-half via XLU roll
            parts = []
            for j in range(heads_per_block):
                tj = t[:, j * head_dim:(j + 1) * head_dim]
                parts.append(tj * cos + pltpu.roll(tj, shift=half, axis=1) * sin)
            return parts[0] if heads_per_block == 1 else jnp.concatenate(parts, axis=1)

        q_ref[0] = rope(q).astype(q_ref.dtype)             # 1/sqrt(hd) already folded into Wq
        k_ref[0] = rope(k).astype(k_ref.dtype)
        v_ref[0] = v.astype(v_ref.dtype)

    return kernel


# ---------------- kernel 2: flash attention over precomputed Q/K/V ----------------
def _make_flash_kernel(tq, tk, mode):
    """mode in {"causal", "mask", "none"}."""

    def body(q_ref, k_ref, v_ref, mask_ref, o_ref, m_sc, l_sc, acc_sc):
        qi = pl.program_id(2)
        ki = pl.program_id(3)

        @pl.when(ki == 0)
        def _():
            m_sc[...] = jnp.full_like(m_sc, NEG_INF)
            l_sc[...] = jnp.zeros_like(l_sc)
            acc_sc[...] = jnp.zeros_like(acc_sc)

        def compute():
            q = q_ref[0]                                   # (tq, hd) bf16, pre-scaled
            k = k_ref[0]                                   # (tk, hd) bf16
            v = v_ref[0]                                   # (tk, hd) bf16
            s = lax.dot_general(q, k, (((1,), (1,)), ((), ())),
                                preferred_element_type=jnp.float32)       # (tq, tk)
            if mode == "causal":
                q_pos = qi * tq + lax.broadcasted_iota(jnp.int32, (tq, tk), 0)
                k_pos = ki * tk + lax.broadcasted_iota(jnp.int32, (tq, tk), 1)
                s = jnp.where(k_pos <= q_pos, s, NEG_INF)
            elif mode == "mask":
                s = s + mask_ref[...]

            m_prev = m_sc[...]
            m_new = jnp.maximum(m_prev, jnp.max(s, axis=-1, keepdims=True))
            alpha = jnp.exp(m_prev - m_new)
            p = jnp.exp(s - m_new)
            l_sc[...] = alpha * l_sc[...] + jnp.sum(p, axis=-1, keepdims=True)
            acc_sc[...] = alpha * acc_sc[...] + jnp.dot(
                p.astype(v.dtype), v, preferred_element_type=jnp.float32)
            m_sc[...] = m_new

        if mode == "causal":
            # Skip MXU/EUP work on fully masked kv tiles (their k/v DMAs are also
            # suppressed by the clamped index_map in the wrapper).
            pl.when(ki * tk < (qi + 1) * tq)(compute)
        else:
            compute()

        @pl.when(ki == pl.num_programs(3) - 1)
        def _():
            # approx=True (EUP vrcp) is an optional cheap knob; exact by default.
            inv = pl.reciprocal(l_sc[...], approx=False)
            o_ref[0] = (acc_sc[...] * inv).astype(o_ref.dtype)

    if mode == "mask":
        return body

    def body_no_mask(q_ref, k_ref, v_ref, o_ref, m_sc, l_sc, acc_sc):
        body(q_ref, k_ref, v_ref, None, o_ref, m_sc, l_sc, acc_sc)

    return body_no_mask


# ---------------- kernel 3: wo projection ----------------
def _wo_kernel(a_ref, w_ref, o_ref):
    @pl.when(pl.program_id(2) == 0)
    def _():
        o_ref[...] = jnp.zeros_like(o_ref)
    # accumulate directly into the resident f32 output block (no scratch copy)
    o_ref[...] += jnp.dot(a_ref[...], w_ref[...], preferred_element_type=jnp.float32)


# ---------------- wrapper ----------------
def attention_forward(x, wq_t, wk_t, wv_t, wo_t, cos, sin, mask=None, *,
                      n_heads, head_dim, causal=False):
    """x: (B,S,D); w*_t: (D,D) pre-transposed (in_features, out_features) so
    x @ w_t == torch's x @ W.T; cos/sin: (S, head_dim); mask: optional additive
    (S,S).  causal=True builds the causal mask in-kernel (mask arg ignored)."""
    bsz, seqlen, dim = x.shape
    assert n_heads * head_dim == dim
    assert head_dim % 128 == 0 or n_heads == 1, "head_dim must be a multiple of 128"

    mode = "causal" if causal else ("mask" if mask is not None else "none")

    half = head_dim // 2
    scale = 1.0 / math.sqrt(head_dim)
    # Sign-folded sin so rotate_half(x)*sin == roll(x, hd/2)*sin_signed.
    sin_signed = jnp.concatenate([-sin[:, :half], sin[:, half:]], axis=-1).astype(jnp.float32)
    cos_f = cos.astype(jnp.float32)

    # bf16 pre-cast of the heavy streams; fold 1/sqrt(head_dim) into Wq (RoPE is linear).
    xb = x.astype(jnp.bfloat16)
    wqb = (wq_t * scale).astype(jnp.bfloat16)
    wkb = wk_t.astype(jnp.bfloat16)
    wvb = wv_t.astype(jnp.bfloat16)
    wob = wo_t.astype(jnp.bfloat16)

    # ---- kernel 1: QKV projection + RoPE ----
    tr = _tile(seqlen, 256)
    n_r = seqlen // tr
    hpb = 2 if n_heads % 2 == 0 else 1            # 2 heads/block -> 256-wide MXU N
    n_hp = n_heads // hpb
    hb = hpb * head_dim

    qkv_shape = jax.ShapeDtypeStruct((bsz, seqlen, dim), jnp.bfloat16)
    q_all, k_all, v_all = pl.pallas_call(
        _make_proj_kernel(head_dim, hpb),
        out_shape=(qkv_shape, qkv_shape, qkv_shape),
        grid_spec=pltpu.PrefetchScalarGridSpec(
            num_scalar_prefetch=0,
            grid=(n_hp, bsz, n_r),                 # weights resident across (b, r)
            in_specs=[
                pl.BlockSpec((1, tr, dim), lambda hp, b, r: (b, r, 0)),    # x rows
                pl.BlockSpec((dim, hb), lambda hp, b, r: (0, hp)),         # wq slice
                pl.BlockSpec((dim, hb), lambda hp, b, r: (0, hp)),         # wk slice
                pl.BlockSpec((dim, hb), lambda hp, b, r: (0, hp)),         # wv slice
                pl.BlockSpec((tr, head_dim), lambda hp, b, r: (r, 0)),     # cos
                pl.BlockSpec((tr, head_dim), lambda hp, b, r: (r, 0)),     # sin'
            ],
            out_specs=(
                pl.BlockSpec((1, tr, hb), lambda hp, b, r: (b, r, hp)),
                pl.BlockSpec((1, tr, hb), lambda hp, b, r: (b, r, hp)),
                pl.BlockSpec((1, tr, hb), lambda hp, b, r: (b, r, hp)),
            )),
        compiler_params=pltpu.CompilerParams(
            dimension_semantics=("parallel", "parallel", "parallel"),
            vmem_limit_bytes=VMEM_LIMIT),
    )(xb, wqb, wkb, wvb, cos_f, sin_signed)

    # ---- kernel 2: flash attention ----
    tq = _tile(seqlen, 256)
    tk = _tile(seqlen, 256, mult=(128 if mode == "mask" else 8))
    n_q, n_k = seqlen // tq, seqlen // tk

    if mode == "causal":
        def kv_map(b, h, qi, ki):
            # Clamp to the last kv tile intersecting the causal band: skipped
            # (fully masked) tiles repeat the previous block index -> no DMA.
            return (b, jnp.minimum(ki, (qi * tq + tq - 1) // tk), h)
    else:
        def kv_map(b, h, qi, ki):
            return (b, ki, h)

    in_specs = [
        pl.BlockSpec((1, tq, head_dim), lambda b, h, qi, ki: (b, qi, h)),  # q
        pl.BlockSpec((1, tk, head_dim), kv_map),                           # k
        pl.BlockSpec((1, tk, head_dim), kv_map),                           # v
    ]
    flash_args = [q_all, k_all, v_all]
    if mode == "mask":
        in_specs.append(pl.BlockSpec((tq, tk), lambda b, h, qi, ki: (qi, ki)))
        flash_args.append(mask.astype(jnp.float32))

    ctx = pl.pallas_call(
        _make_flash_kernel(tq, tk, mode),
        out_shape=jax.ShapeDtypeStruct((bsz, seqlen, dim), jnp.bfloat16),
        grid_spec=pltpu.PrefetchScalarGridSpec(
            num_scalar_prefetch=0,
            grid=(bsz, n_heads, n_q, n_k),
            in_specs=in_specs,
            out_specs=pl.BlockSpec((1, tq, head_dim),
                                   lambda b, h, qi, ki: (b, qi, h)),
            scratch_shapes=[
                pltpu.VMEM((tq, 1), jnp.float32),          # running max
                pltpu.VMEM((tq, 1), jnp.float32),          # running denom
                pltpu.VMEM((tq, head_dim), jnp.float32),   # output accumulator
            ]),
        compiler_params=pltpu.CompilerParams(
            dimension_semantics=("parallel", "parallel", "parallel", "arbitrary"),
            vmem_limit_bytes=VMEM_LIMIT),
    )(*flash_args)

    # ---- kernel 3: wo projection ----
    rows = bsz * seqlen
    ctx2 = ctx.reshape(rows, dim)
    tro = _tile(rows, 256)
    tn = _tile(dim, 256, mult=128)
    tkd = _tile(dim, 512, mult=128)

    out2 = pl.pallas_call(
        _wo_kernel,
        out_shape=jax.ShapeDtypeStruct((rows, dim), jnp.float32),
        grid_spec=pltpu.PrefetchScalarGridSpec(
            num_scalar_prefetch=0,
            grid=(rows // tro, dim // tn, dim // tkd),
            in_specs=[
                pl.BlockSpec((tro, tkd), lambda r, n, kd: (r, kd)),
                pl.BlockSpec((tkd, tn), lambda r, n, kd: (kd, n)),
            ],
            out_specs=pl.BlockSpec((tro, tn), lambda r, n, kd: (r, n))),
        compiler_params=pltpu.CompilerParams(
            dimension_semantics=("parallel", "parallel", "arbitrary"),
            vmem_limit_bytes=VMEM_LIMIT),
    )(ctx2, wob)

    return out2.reshape(bsz, seqlen, dim).astype(x.dtype)


# ---------------- pure-JAX reference (mirrors the torch module, f32) ----------------
def _rotate_half(x):
    half = x.shape[-1] // 2
    return jnp.concatenate([-x[..., half:], x[..., :half]], axis=-1)


def reference_attention(x, wq_t, wk_t, wv_t, wo_t, cos, sin, mask, *, n_heads, head_dim):
    bsz, seqlen, dim = x.shape
    xq = (x @ wq_t).reshape(bsz, seqlen, n_heads, head_dim)
    xk = (x @ wk_t).reshape(bsz, seqlen, n_heads, head_dim)
    xv = (x @ wv_t).reshape(bsz, seqlen, n_heads, head_dim)
    c = cos[None, :, None, :]
    s = sin[None, :, None, :]
    xq = xq * c + _rotate_half(xq) * s
    xk = xk * c + _rotate_half(xk) * s
    xq = xq.transpose(0, 2, 1, 3)
    xk = xk.transpose(0, 2, 1, 3)
    xv = xv.transpose(0, 2, 1, 3)
    scores = jnp.einsum("bhqd,bhkd->bhqk", xq, xk) / math.sqrt(head_dim)
    if mask is not None:
        scores = scores + mask[None, None]
    scores = jax.nn.softmax(scores.astype(jnp.float32), axis=-1)
    out = jnp.einsum("bhqk,bhkd->bhqd", scores, xv)
    out = out.transpose(0, 2, 1, 3).reshape(bsz, seqlen, -1)
    return out @ wo_t


if __name__ == "__main__":
    # Small config consistent with the module: dim = n_heads * head_dim
    bsz, seqlen = 2, 8
    n_heads, head_dim = 2, 128
    dim = n_heads * head_dim   # 256

    key = jax.random.PRNGKey(0)
    kx, kq, kk, kv, ko = jax.random.split(key, 5)

    x = jax.random.normal(kx, (bsz, seqlen, dim), dtype=jnp.float32)

    # "nn.Linear(dim, dim, bias=False)" weights, stored pre-transposed
    # (in_features, out_features) so x @ W_t == torch's x @ W.T.
    wq_t = jax.random.normal(kq, (dim, dim), dtype=jnp.float32) * 0.02
    wk_t = jax.random.normal(kk, (dim, dim), dtype=jnp.float32) * 0.02
    wv_t = jax.random.normal(kv, (dim, dim), dtype=jnp.float32) * 0.02
    wo_t = jax.random.normal(ko, (dim, dim), dtype=jnp.float32) * 0.02

    # Rotary embeddings: (seq, head_dim)
    inv_freq = 1.0 / (10000.0 ** (jnp.arange(0, head_dim, 2, dtype=jnp.float32) / head_dim))
    pos = jnp.arange(seqlen, dtype=jnp.float32)
    freqs = pos[:, None] * inv_freq[None, :]
    emb = jnp.concatenate([freqs, freqs], axis=-1)
    cos, sin = jnp.cos(emb), jnp.sin(emb)

    # Additive causal mask (S, S) for the reference / explicit-mask path.
    mask = jnp.where(jnp.tril(jnp.ones((seqlen, seqlen), dtype=bool)),
                     0.0, -1e9).astype(jnp.float32)

    ref = reference_attention(x, wq_t, wk_t, wv_t, wo_t, cos, sin, mask,
                              n_heads=n_heads, head_dim=head_dim)

    # In-kernel causal mask path (no (S,S) mask DMA).
    out_causal = attention_forward(x, wq_t, wk_t, wv_t, wo_t, cos, sin, mask=None,
                                   n_heads=n_heads, head_dim=head_dim, causal=True)
    out_causal = jax.block_until_ready(out_causal)
    assert out_causal.shape == (bsz, seqlen, dim)
    # bf16 MXU matmuls (f32 accumulation) vs f32 reference -> loosened tolerance.
    assert jnp.allclose(out_causal, ref, rtol=2e-2, atol=2e-2), "causal path mismatch"

    # Explicit arbitrary-mask fallback path (module semantics).
    out_mask = attention_forward(x, wq_t, wk_t, wv_t, wo_t, cos, sin, mask=mask,
                                 n_heads=n_heads, head_dim=head_dim, causal=False)
    out_mask = jax.block_until_ready(out_mask)
    assert jnp.allclose(out_mask, ref, rtol=2e-2, atol=2e-2), "explicit-mask path mismatch"

    print("KERNEL_OK")
</pallas_src>

<mosaic_0001>
module attributes {stable_mosaic.version = 11 : i64} {
  func.func @kernel(%arg0: i32, %arg1: i32, %arg2: i32, %arg3: memref<1x8x256xbf16, #tpu.memory_space<vmem>>, %arg4: memref<256x256xbf16, #tpu.memory_space<vmem>>, %arg5: memref<256x256xbf16, #tpu.memory_space<vmem>>, %arg6: memref<256x256xbf16, #tpu.memory_space<vmem>>, %arg7: memref<8x128xf32, #tpu.memory_space<vmem>>, %arg8: memref<8x128xf32, #tpu.memory_space<vmem>>, %arg9: memref<1x8x256xbf16, #tpu.memory_space<vmem>>, %arg10: memref<1x8x256xbf16, #tpu.memory_space<vmem>>, %arg11: memref<1x8x256xbf16, #tpu.memory_space<vmem>>) attributes {dimension_semantics = [#tpu.dimension_semantics<parallel>, #tpu.dimension_semantics<parallel>, #tpu.dimension_semantics<parallel>], iteration_bounds = array<i64: 1, 2, 1>, scalar_prefetch = 0 : i64, scratch_operands = 0 : i64, tpu.core_type = #tpu.core_type<tc>, window_params = [{transform_indices = @transform_0, window_bounds = array<i64: 1, 8, 256>}, {transform_indices = @transform_1, window_bounds = array<i64: 256, 256>}, {transform_indices = @transform_2, window_bounds = array<i64: 256, 256>}, {transform_indices = @transform_3, window_bounds = array<i64: 256, 256>}, {transform_indices = @transform_4, window_bounds = array<i64: 8, 128>}, {transform_indices = @transform_5, window_bounds = array<i64: 8, 128>}, {transform_indices = @transform_6, window_bounds = array<i64: 1, 8, 256>}, {transform_indices = @transform_7, window_bounds = array<i64: 1, 8, 256>}, {transform_indices = @transform_8, window_bounds = array<i64: 1, 8, 256>}]} {
    %c0 = arith.constant 0 : index
    %c0_0 = arith.constant 0 : index
    %c0_1 = arith.constant 0 : index
    %0 = vector.load %arg3[%c0, %c0_0, %c0_1] : memref<1x8x256xbf16, #tpu.memory_space<vmem>>, vector<1x8x256xbf16>
    %1 = vector.shape_cast %0 : vector<1x8x256xbf16> to vector<8x256xbf16>
    %c0_2 = arith.constant 0 : index
    %c0_3 = arith.constant 0 : index
    %2 = vector.load %arg7[%c0_2, %c0_3] : memref<8x128xf32, #tpu.memory_space<vmem>>, vector<8x128xf32>
    %c0_4 = arith.constant 0 : index
    %c0_5 = arith.constant 0 : index
    %3 = vector.load %arg8[%c0_4, %c0_5] : memref<8x128xf32, #tpu.memory_space<vmem>>, vector<8x128xf32>
    %c0_6 = arith.constant 0 : index
    %c0_7 = arith.constant 0 : index
    %4 = vector.load %arg4[%c0_6, %c0_7] : memref<256x256xbf16, #tpu.memory_space<vmem>>, vector<256x256xbf16>
    %cst = arith.constant dense<0.000000e+00> : vector<8x256xf32>
    %5 = tpu.matmul %1, %4, %cst {dimension_numbers = #tpu.dot_dimension_numbers<[1], [0], [0], [1], [0, 0, 1, 1], [], []>} : vector<8x256xbf16>, vector<256x256xbf16>, vector<8x256xf32> -> vector<8x256xf32>
    %c0_8 = arith.constant 0 : index
    %c0_9 = arith.constant 0 : index
    %6 = vector.load %arg5[%c0_8, %c0_9] : memref<256x256xbf16, #tpu.memory_space<vmem>>, vector<256x256xbf16>
    %cst_10 = arith.constant dense<0.000000e+00> : vector<8x256xf32>
    %7 = tpu.matmul %1, %6, %cst_10 {dimension_numbers = #tpu.dot_dimension_numbers<[1], [0], [0], [1], [0, 0, 1, 1], [], []>} : vector<8x256xbf16>, vector<256x256xbf16>, vector<8x256xf32> -> vector<8x256xf32>
    %c0_11 = arith.constant 0 : index
    %c0_12 = arith.constant 0 : index
    %8 = vector.load %arg6[%c0_11, %c0_12] : memref<256x256xbf16, #tpu.memory_space<vmem>>, vector<256x256xbf16>
    %cst_13 = arith.constant dense<0.000000e+00> : vector<8x256xf32>
    %9 = tpu.matmul %1, %8, %cst_13 {dimension_numbers = #tpu.dot_dimension_numbers<[1], [0], [0], [1], [0, 0, 1, 1], [], []>} : vector<8x256xbf16>, vector<256x256xbf16>, vector<8x256xf32> -> vector<8x256xf32>
    %10 = vector.extract_strided_slice %5 {offsets = [0, 0], sizes = [8, 128], strides = [1, 1]} : vector<8x256xf32> to vector<8x128xf32>
    %11 = arith.mulf %10, %2 : vector<8x128xf32>
    %c64_i32 = arith.constant 64 : i32
    %12 = tpu.dynamic_rotate %10 by %c64_i32 dim 1 : vector<8x128xf32>, i32 -> vector<8x128xf32>
    %13 = arith.mulf %12, %3 : vector<8x128xf32>
    %14 = arith.addf %11, %13 : vector<8x128xf32>
    %15 = vector.extract_strided_slice %5 {offsets = [0, 128], sizes = [8, 128], strides = [1, 1]} : vector<8x256xf32> to vector<8x128xf32>
    %16 = arith.mulf %15, %2 : vector<8x128xf32>
    %c64_i32_14 = arith.constant 64 : i32
    %17 = tpu.dynamic_rotate %15 by %c64_i32_14 dim 1 : vector<8x128xf32>, i32 -> vector<8x128xf32>
    %18 = arith.mulf %17, %3 : vector<8x128xf32>
    %19 = arith.addf %16, %18 : vector<8x128xf32>
    %20 = tpu.concatenate %14, %19 in 1 : vector<8x128xf32>, vector<8x128xf32> -> vector<8x256xf32>
    %21 = arith.truncf %20 : vector<8x256xf32> to vector<8x256xbf16>
    %c0_15 = arith.constant 0 : index
    %c0_16 = arith.constant 0 : index
    %c0_17 = arith.constant 0 : index
    %22 = vector.load %arg9[%c0_15, %c0_16, %c0_17] : memref<1x8x256xbf16, #tpu.memory_space<vmem>>, vector<1x8x256xbf16>
    %23 = vector.shape_cast %22 : vector<1x8x256xbf16> to vector<8x256xbf16>
    %24 = vector.shape_cast %21 : vector<8x256xbf16> to vector<1x8x256xbf16>
    tpu.vector_store %arg9[%c0_15, %c0_16, %c0_17], %24 {strides = array<i32>} : memref<1x8x256xbf16, #tpu.memory_space<vmem>>, vector<1x8x256xbf16>,
    %25 = vector.extract_strided_slice %7 {offsets = [0, 0], sizes = [8, 128], strides = [1, 1]} : vector<8x256xf32> to vector<8x128xf32>
    %26 = arith.mulf %25, %2 : vector<8x128xf32>
    %c64_i32_18 = arith.constant 64 : i32
    %27 = tpu.dynamic_rotate %25 by %c64_i32_18 dim 1 : vector<8x128xf32>, i32 -> vector<8x128xf32>
    %28 = arith.mulf %27, %3 : vector<8x128xf32>
    %29 = arith.addf %26, %28 : vector<8x128xf32>
    %30 = vector.extract_strided_slice %7 {offsets = [0, 128], sizes = [8, 128], strides = [1, 1]} : vector<8x256xf32> to vector<8x128xf32>
    %31 = arith.mulf %30, %2 : vector<8x128xf32>
    %c64_i32_19 = arith.constant 64 : i32
    %32 = tpu.dynamic_rotate %30 by %c64_i32_19 dim 1 : vector<8x128xf32>, i32 -> vector<8x128xf32>
    %33 = arith.mulf %32, %3 : vector<8x128xf32>
    %34 = arith.addf %31, %33 : vector<8x128xf32>
    %35 = tpu.concatenate %29, %34 in 1 : vector<8x128xf32>, vector<8x128xf32> -> vector<8x256xf32>
    %36 = arith.truncf %35 : vector<8x256xf32> to vector<8x256xbf16>
    %c0_20 = arith.constant 0 : index
    %c0_21 = arith.constant 0 : index
    %c0_22 = arith.constant 0 : index
    %37 = vector.load %arg10[%c0_20, %c0_21, %c0_22] : memref<1x8x256xbf16, #tpu.memory_space<vmem>>, vector<1x8x256xbf16>
    %38 = vector.shape_cast %37 : vector<1x8x256xbf16> to vector<8x256xbf16>
    %39 = vector.shape_cast %36 : vector<8x256xbf16> to vector<1x8x256xbf16>
    tpu.vector_store %arg10[%c0_20, %c0_21, %c0_22], %39 {strides = array<i32>} : memref<1x8x256xbf16, #tpu.memory_space<vmem>>, vector<1x8x256xbf16>,
    %40 = arith.truncf %9 : vector<8x256xf32> to vector<8x256xbf16>
    %c0_23 = arith.constant 0 : index
    %c0_24 = arith.constant 0 : index
    %c0_25 = arith.constant 0 : index
    %41 = vector.load %arg11[%c0_23, %c0_24, %c0_25] : memref<1x8x256xbf16, #tpu.memory_space<vmem>>, vector<1x8x256xbf16>
    %42 = vector.shape_cast %41 : vector<1x8x256xbf16> to vector<8x256xbf16>
    %43 = vector.shape_cast %40 : vector<8x256xbf16> to vector<1x8x256xbf16>
    tpu.vector_store %arg11[%c0_23, %c0_24, %c0_25], %43 {strides = array<i32>} : memref<1x8x256xbf16, #tpu.memory_space<vmem>>, vector<1x8x256xbf16>,
    return
  }
  func.func @transform_0(%arg0: i32, %arg1: i32, %arg2: i32) -> (i32, i32, i32) {
    %c0_i32 = arith.constant 0 : i32
    %c0_i32_0 = arith.constant 0 : i32
    return %arg1, %arg2, %c0_i32 : i32, i32, i32
  }
  func.func @transform_1(%arg0: i32, %arg1: i32, %arg2: i32) -> (i32, i32) {
    %c0_i32 = arith.constant 0 : i32
    %c0_i32_0 = arith.constant 0 : i32
    return %c0_i32, %arg0 : i32, i32
  }
  func.func @transform_2(%arg0: i32, %arg1: i32, %arg2: i32) -> (i32, i32) {
    %c0_i32 = arith.constant 0 : i32
    %c0_i32_0 = arith.constant 0 : i32
    return %c0_i32, %arg0 : i32, i32
  }
  func.func @transform_3(%arg0: i32, %arg1: i32, %arg2: i32) -> (i32, i32) {
    %c0_i32 = arith.constant 0 : i32
    %c0_i32_0 = arith.constant 0 : i32
    return %c0_i32, %arg0 : i32, i32
  }
  func.func @transform_4(%arg0: i32, %arg1: i32, %arg2: i32) -> (i32, i32) {
    %c0_i32 = arith.constant 0 : i32
    %c0_i32_0 = arith.constant 0 : i32
    return %arg2, %c0_i32 : i32, i32
  }
  func.func @transform_5(%arg0: i32, %arg1: i32, %arg2: i32) -> (i32, i32) {
    %c0_i32 = arith.constant 0 : i32
    %c0_i32_0 = arith.constant 0 : i32
    return %arg2, %c0_i32 : i32, i32
  }
  func.func @transform_6(%arg0: i32, %arg1: i32, %arg2: i32) -> (i32, i32, i32) {
    %c0_i32 = arith.constant 0 : i32
    return %arg1, %arg2, %arg0 : i32, i32, i32
  }
  func.func @transform_7(%arg0: i32, %arg1: i32, %arg2: i32) -> (i32, i32, i32) {
    %c0_i32 = arith.constant 0 : i32
    return %arg1, %arg2, %arg0 : i32, i32, i32
  }
  func.func @transform_8(%arg0: i32, %arg1: i32, %arg2: i32) -> (i32, i32, i32) {
    %c0_i32 = arith.constant 0 : i32
    return %arg1, %arg2, %arg0 : i32, i32, i32
  }
}

</mosaic_0001>

<llo_original>
// kernel: tpu_custom_call.1
$region0: #{tpu_custom_call.1}
  #allocation0 [shape = 'u32[]', space=smem, size = 0x4, offset = 0x4, fixed_abs, tag = 'smem constant byte address 0x4 - core index']
  #allocation1 [shape = 'u32[144,128]{1,0:T(1,128)}', space=vmem, size = 0x12000, scoped, tag = 'internal scratch']
  %s0 = inlined_call_operand.hbm [shape: bf16[2,8,256], index: 0, kind: input, shape index: {}]
  %s1 = inlined_call_operand.hbm [shape: bf16[256,256], index: 1, kind: input, shape index: {}]
  %s2 = inlined_call_operand.hbm [shape: bf16[256,256], index: 2, kind: input, shape index: {}]
  %s3 = inlined_call_operand.hbm [shape: bf16[256,256], index: 3, kind: input, shape index: {}]
  %s4 = inlined_call_operand.hbm [shape: f32[8,128], index: 4, kind: input, shape index: {}]
  %s5 = inlined_call_operand.vmem [shape: f32[8,128], index: 5, kind: input, shape index: {}]
  %s6 = inlined_call_operand.hbm [shape: bf16[2,8,256], index: 6, kind: output, shape index: {0}]
  %s7 = inlined_call_operand.hbm [shape: bf16[2,8,256], index: 7, kind: output, shape index: {1}]
  %s8 = inlined_call_operand.hbm [shape: bf16[2,8,256], index: 8, kind: output, shape index: {2}]
  %9 = xla_tuple %s6, %s7, %s8
  %s10 = sld [smem:[#allocation0]]
  $region93: #{tpu_custom_call.1} parent=0
    _
  %s12 = ssub.s32 1, %s10
  %s13 = scalar_select 0, %s12, %s10
  $region1: #{tpu_custom_call.1} parent=0
    #allocation2 [shape = 'u8[8192]{0}', space=vmem, size = 0x2000, scoped, tag = 'input window, operand 0']
    #allocation3 [shape = 's32[2]{0}', space=sflag, size = 0x8, scoped, tag = 'scoped memory for tpu_custom_call.1']
    #allocation4 [shape = 's32[2]{0}', space=sflag, size = 0x8, scoped, tag = 'scoped memory for tpu_custom_call.1']
    #allocation5 [shape = 'u8[131072]{0}', space=vmem, size = 0x20000, scoped, tag = 'input window, operand 1, single buffered']
    #allocation6 [shape = 's32[1]{0}', space=sflag, size = 0x4, scoped, tag = 'scoped memory for tpu_custom_call.1']
    #allocation7 [shape = 'u8[131072]{0}', space=vmem, size = 0x20000, scoped, tag = 'input window, operand 2, single buffered']
    #allocation8 [shape = 'u8[131072]{0}', space=vmem, size = 0x20000, scoped, tag = 'input window, operand 3, single buffered']
    #allocation9 [shape = 's32[1]{0}', space=sflag, size = 0x4, scoped, tag = 'scoped memory for tpu_custom_call.1']
    #allocation10 [shape = 'u8[4096]{0}', space=vmem, size = 0x1000, scoped, tag = 'input window, operand 4, single buffered']
    #allocation11 [shape = 'u8[8192]{0}', space=vmem, size = 0x2000, scoped, tag = 'output window, operand 0']
    #allocation12 [shape = 'u8[8192]{0}', space=vmem, size = 0x2000, scoped, tag = 'output window, operand 1']
    #allocation13 [shape = 's32[2]{0}', space=sflag, size = 0x8, scoped, tag = 'scoped memory for tpu_custom_call.1']
    #allocation14 [shape = 'u8[8192]{0}', space=vmem, size = 0x2000, scoped, tag = 'output window, operand 2']
    %14 = vsyncpa [#allocation3], 0
    %s15 = scalar_lea.sflag [#allocation3], 1
    %16 = vsyncpa %s15, 0
    %17 = vsyncpa [#allocation6], 0
    %18 = vsyncpa [#allocation9], 0
    %19 = vsyncpa [#allocation4], 0
    %s20 = scalar_lea.sflag [#allocation4], 1
    %21 = vsyncpa %s20, 0
    %22 = vsyncpa [#allocation13], 0
    %s23 = scalar_lea.sflag [#allocation13], 1
    %24 = vsyncpa %s23, 0
    loop: start=0, step=1, limit=4
    $region2: #{tpu_custom_call.1} parent=1 // loop_pre_header
      _
    $region3: #{tpu_custom_call.1} parent=1 // loop_header
      %s26 = sphi 0, %s30
      %p27 = scmp.ge.s32.totalorder %s26, 4
      %s33 = sphi 0, %s52
      %s34 = sphi 0, %s48
      %s35 = sphi 0, %s44
      %s36 = sphi 0, %s33
      %s37 = sphi 0, %s34
      %s38 = sphi 0, %s35
      %s39 = sphi 0, %s36
      %s40 = sphi 0, %s37
      %s41 = sphi 0, %s38
      %s57 = sphi 0, %s59
      %s60 = sphi 0, %s57
      %s61 = sphi 0, %s60
      %s77 = sphi 0, %s61
      %s83 = sphi 0, %s85
      %s86 = sphi 0, %s83
      %s87 = sphi 0, %s86
      %s103 = sphi 0, %s87
      %s109 = sphi 0, %s111
      %s112 = sphi 0, %s109
      %s113 = sphi 0, %s112
      %s129 = sphi 0, %s113
      %s135 = sphi 0, %s137
      %s138 = sphi 0, %s135
      %s139 = sphi 0, %s138
      %s155 = sphi 0, %s139
      %s161 = sphi 0, %s163
      %s164 = sphi 0, %s161
      %s165 = sphi 0, %s164
      %s181 = sphi 0, %s165
      %s187 = sphi 0, %s189
      %s190 = sphi 0, %s187
      %s191 = sphi 0, %s190
      %s207 = sphi 0, %s191
      %s217 = sphi 0, %s219
      %s220 = sphi 0, %s217
      %s221 = sphi 0, %s220
      %s237 = sphi 0, %s221
      %s247 = sphi 0, %s249
      %s250 = sphi 0, %s247
      %s251 = sphi 0, %s250
      %s267 = sphi 0, %s251
      %s277 = sphi 0, %s279
      %s280 = sphi 0, %s277
      %s281 = sphi 0, %s280
      %s297 = sphi 0, %s281
    $region4: #{tpu_custom_call.1} parent=1 // loop_header_branch
      %29 = sbr.rel (%p27) target = $region8
    $region5: #{tpu_custom_call.1} parent=1 // loop_body
      %s31 = ssub.s32 %s26, 1
      %s32 = ssub.s32 %s26, 2
      %s42 = sadd.s32 1, %s35
      %p43 = scmp.ge.s32.totalorder %s42, 1
      %s44 = scalar_select %p43, 0, %s42
      %s45 = sadd.s32 1, %s34
      %s46 = scalar_select %p43, %s45, %s34
      %p47 = scmp.ge.s32.totalorder %s46, 2
      %s48 = scalar_select %p47, 0, %s46
      %s49 = sadd.s32 1, %s33
      %s50 = scalar_select %p47, %s49, %s33
      %p51 = scmp.ge.s32.totalorder %s50, 1
      %s52 = scalar_select %p51, 0, %s50
      %s53 = ssub.s32 %s34, %s48
      %s54 = ssub.s32 %s35, %s44
      %s55 = sor.u32 %s53, %s54
      %p56 = scmp.eq.s32.totalorder %s55, 0
      %s58 = sadd.s32 %s57, 1
      %s59 = scalar_select %p56, %s57, %s58
      %p62 = pneg %p56
      %p63 = scmp.eq.s32.totalorder %s26, 1
      %p64 = por %p62, %p63
      %p65 = scmp.ne.s32.totalorder %s57, %s60
      %p66 = scmp.eq.s32.totalorder %s26, 0
      %p67 = por %p65, %p66
      %p68 = scmp.ne.s32.totalorder %s57, %s60
      %p69 = scmp.eq.s32.totalorder %s31, 1
      %p70 = por %p68, %p69
      %p71 = scmp.ne.s32.totalorder %s60, %s61
      %p72 = scmp.eq.s32.totalorder %s31, 0
      %p73 = por %p71, %p72
      %p74 = scmp.ne.s32.totalorder %s60, %s61
      %p75 = scmp.eq.s32.totalorder %s32, 1
      %p76 = por %p74, %p75
      %p78 = scmp.ne.s32.totalorder %s61, %s77
      %p79 = scmp.eq.s32.totalorder %s32, 0
      %p80 = por %p78, %p79
      %s81 = ssub.s32 %s33, %s52
      %p82 = scmp.eq.s32.totalorder %s81, 0
      %s84 = sadd.s32 %s83, 1
      %s85 = scalar_select %p82, %s83, %s84
      %p88 = pneg %p82
      %p89 = scmp.eq.s32.totalorder %s26, 1
      %p90 = por %p88, %p89
      %p91 = scmp.ne.s32.totalorder %s83, %s86
      %p92 = scmp.eq.s32.totalorder %s26, 0
      %p93 = por %p91, %p92
      %p94 = scmp.ne.s32.totalorder %s83, %s86
      %p95 = scmp.eq.s32.totalorder %s31, 1
      %p96 = por %p94, %p95
      %p97 = scmp.ne.s32.totalorder %s86, %s87
      %p98 = scmp.eq.s32.totalorder %s31, 0
      %p99 = por %p97, %p98
      %p100 = scmp.ne.s32.totalorder %s86, %s87
      %p101 = scmp.eq.s32.totalorder %s32, 1
      %p102 = por %p100, %p101
      %p104 = scmp.ne.s32.totalorder %s87, %s103
      %p105 = scmp.eq.s32.totalorder %s32, 0
      %p106 = por %p104, %p105
      %s107 = ssub.s32 %s33, %s52
      %p108 = scmp.eq.s32.totalorder %s107, 0
      %s110 = sadd.s32 %s109, 1
      %s111 = scalar_select %p108, %s109, %s110
      %p114 = pneg %p108
      %p115 = scmp.eq.s32.totalorder %s26, 1
      %p116 = por %p114, %p115
      %p117 = scmp.ne.s32.totalorder %s109, %s112
      %p118 = scmp.eq.s32.totalorder %s26, 0
      %p119 = por %p117, %p118
      %p120 = scmp.ne.s32.totalorder %s109, %s112
      %p121 = scmp.eq.s32.totalorder %s31, 1
      %p122 = por %p120, %p121
      %p123 = scmp.ne.s32.totalorder %s112, %s113
      %p124 = scmp.eq.s32.totalorder %s31, 0
      %p125 = por %p123, %p124
      %p126 = scmp.ne.s32.totalorder %s112, %s113
      %p127 = scmp.eq.s32.totalorder %s32, 1
      %p128 = por %p126, %p127
      %p130 = scmp.ne.s32.totalorder %s113, %s129
      %p131 = scmp.eq.s32.totalorder %s32, 0
      %p132 = por %p130, %p131
      %s133 = ssub.s32 %s33, %s52
      %p134 = scmp.eq.s32.totalorder %s133, 0
      %s136 = sadd.s32 %s135, 1
      %s137 = scalar_select %p134, %s135, %s136
      %p140 = pneg %p134
      %p141 = scmp.eq.s32.totalorder %s26, 1
      %p142 = por %p140, %p141
      %p143 = scmp.ne.s32.totalorder %s135, %s138
      %p144 = scmp.eq.s32.totalorder %s26, 0
      %p145 = por %p143, %p144
      %p146 = scmp.ne.s32.totalorder %s135, %s138
      %p147 = scmp.eq.s32.totalorder %s31, 1
      %p148 = por %p146, %p147
      %p149 = scmp.ne.s32.totalorder %s138, %s139
      %p150 = scmp.eq.s32.totalorder %s31, 0
      %p151 = por %p149, %p150
      %p152 = scmp.ne.s32.totalorder %s138, %s139
      %p153 = scmp.eq.s32.totalorder %s32, 1
      %p154 = por %p152, %p153
      %p156 = scmp.ne.s32.totalorder %s139, %s155
      %p157 = scmp.eq.s32.totalorder %s32, 0
      %p158 = por %p156, %p157
      %s159 = ssub.s32 %s35, %s44
      %p160 = scmp.eq.s32.totalorder %s159, 0
      %s162 = sadd.s32 %s161, 1
      %s163 = scalar_select %p160, %s161, %s162
      %p166 = pneg %p160
      %p167 = scmp.eq.s32.totalorder %s26, 1
      %p168 = por %p166, %p167
      %p169 = scmp.ne.s32.totalorder %s161, %s164
      %p170 = scmp.eq.s32.totalorder %s26, 0
      %p171 = por %p169, %p170
      %p172 = scmp.ne.s32.totalorder %s161, %s164
      %p173 = scmp.eq.s32.totalorder %s31, 1
      %p174 = por %p172, %p173
      %p175 = scmp.ne.s32.totalorder %s164, %s165
      %p176 = scmp.eq.s32.totalorder %s31, 0
      %p177 = por %p175, %p176
      %p178 = scmp.ne.s32.totalorder %s164, %s165
      %p179 = scmp.eq.s32.totalorder %s32, 1
      %p180 = por %p178, %p179
      %p182 = scmp.ne.s32.totalorder %s165, %s181
      %p183 = scmp.eq.s32.totalorder %s32, 0
      %p184 = por %p182, %p183
      %s185 = ssub.s32 %s35, %s44
      %p186 = scmp.eq.s32.totalorder %s185, 0
      %s188 = sadd.s32 %s187, 1
      %s189 = scalar_select %p186, %s187, %s188
      %p192 = pneg %p186
      %p193 = scmp.eq.s32.totalorder %s26, 1
      %p194 = por %p192, %p193
      %p195 = scmp.ne.s32.totalorder %s187, %s190
      %p196 = scmp.eq.s32.totalorder %s26, 0
      %p197 = por %p195, %p196
      %p198 = scmp.ne.s32.totalorder %s187, %s190
      %p199 = scmp.eq.s32.totalorder %s31, 1
      %p200 = por %p198, %p199
      %p201 = scmp.ne.s32.totalorder %s190, %s191
      %p202 = scmp.eq.s32.totalorder %s31, 0
      %p203 = por %p201, %p202
      %p204 = scmp.ne.s32.totalorder %s190, %s191
      %p205 = scmp.eq.s32.totalorder %s32, 1
      %p206 = por %p204, %p205
      %p208 = scmp.ne.s32.totalorder %s191, %s207
      %p209 = scmp.eq.s32.totalorder %s32, 0
      %p210 = por %p208, %p209
      %s211 = ssub.s32 %s34, %s48
      %s212 = ssub.s32 %s35, %s44
      %s213 = sor.u32 %s211, %s212
      %s214 = ssub.s32 %s33, %s52
      %s215 = sor.u32 %s213, %s214
      %p216 = scmp.eq.s32.totalorder %s215, 0
      %s218 = sadd.s32 %s217, 1
      %s219 = scalar_select %p216, %s217, %s218
      %p222 = pneg %p216
      %p223 = scmp.eq.s32.totalorder %s26, 1
      %p224 = por %p222, %p223
      %p225 = scmp.ne.s32.totalorder %s217, %s220
      %p226 = scmp.eq.s32.totalorder %s26, 0
      %p227 = por %p225, %p226
      %p228 = scmp.ne.s32.totalorder %s217, %s220
      %p229 = scmp.eq.s32.totalorder %s31, 1
      %p230 = por %p228, %p229
      %p231 = scmp.ne.s32.totalorder %s220, %s221
      %p232 = scmp.eq.s32.totalorder %s31, 0
      %p233 = por %p231, %p232
      %p234 = scmp.ne.s32.totalorder %s220, %s221
      %p235 = scmp.eq.s32.totalorder %s32, 1
      %p236 = por %p234, %p235
      %p238 = scmp.ne.s32.totalorder %s221, %s237
      %p239 = scmp.eq.s32.totalorder %s32, 0
      %p240 = por %p238, %p239
      %s241 = ssub.s32 %s34, %s48
      %s242 = ssub.s32 %s35, %s44
      %s243 = sor.u32 %s241, %s242
      %s244 = ssub.s32 %s33, %s52
      %s245 = sor.u32 %s243, %s244
      %p246 = scmp.eq.s32.totalorder %s245, 0
      %s248 = sadd.s32 %s247, 1
      %s249 = scalar_select %p246, %s247, %s248
      %p252 = pneg %p246
      %p253 = scmp.eq.s32.totalorder %s26, 1
      %p254 = por %p252, %p253
      %p255 = scmp.ne.s32.totalorder %s247, %s250
      %p256 = scmp.eq.s32.totalorder %s26, 0
      %p257 = por %p255, %p256
      %p258 = scmp.ne.s32.totalorder %s247, %s250
      %p259 = scmp.eq.s32.totalorder %s31, 1
      %p260 = por %p258, %p259
      %p261 = scmp.ne.s32.totalorder %s250, %s251
      %p262 = scmp.eq.s32.totalorder %s31, 0
      %p263 = por %p261, %p262
      %p264 = scmp.ne.s32.totalorder %s250, %s251
      %p265 = scmp.eq.s32.totalorder %s32, 1
      %p266 = por %p264, %p265
      %p268 = scmp.ne.s32.totalorder %s251, %s267
      %p269 = scmp.eq.s32.totalorder %s32, 0
      %p270 = por %p268, %p269
      %s271 = ssub.s32 %s34, %s48
      %s272 = ssub.s32 %s35, %s44
      %s273 = sor.u32 %s271, %s272
      %s274 = ssub.s32 %s33, %s52
      %s275 = sor.u32 %s273, %s274
      %p276 = scmp.eq.s32.totalorder %s275, 0
      %s278 = sadd.s32 %s277, 1
      %s279 = scalar_select %p276, %s277, %s278
      %p282 = pneg %p276
      %p283 = scmp.eq.s32.totalorder %s26, 1
      %p284 = por %p282, %p283
      %p285 = scmp.ne.s32.totalorder %s277, %s280
      %p286 = scmp.eq.s32.totalorder %s26, 0
      %p287 = por %p285, %p286
      %p288 = scmp.ne.s32.totalorder %s277, %s280
      %p289 = scmp.eq.s32.totalorder %s31, 1
      %p290 = por %p288, %p289
      %p291 = scmp.ne.s32.totalorder %s280, %s281
      %p292 = scmp.eq.s32.totalorder %s31, 0
      %p293 = por %p291, %p292
      %p294 = scmp.ne.s32.totalorder %s280, %s281
      %p295 = scmp.eq.s32.totalorder %s32, 1
      %p296 = por %p294, %p295
      %p298 = scmp.ne.s32.totalorder %s281, %s297
      %p299 = scmp.eq.s32.totalorder %s32, 0
      %p300 = por %p298, %p299
      %p301 = scmp.le.s32.totalorder 1, %s26
      %p302 = scmp.lt.s32.totalorder %s26, 3
      %p303 = pnand %p301, %p302
      %p304 = pneg %p303
      // Predicated region
      $region9: #{tpu_custom_call.1} parent=5 // pred_check
        _
      $region10: #{tpu_custom_call.1} parent=5 // pred_check_branch
        %306 = sbr.rel (%p303) target = $region12
      $region11: #{tpu_custom_call.1} parent=5 // pred_region
        %s307 = ssub.s32 %s26, 1
        // Predicated region
        $region13: #{tpu_custom_call.1} parent=11 // pred_check
          %p308 = pneg %p99
        $region14: #{tpu_custom_call.1} parent=11 // pred_check_branch
          %310 = sbr.rel (%p308) target = $region16
        $region15: #{tpu_custom_call.1} parent=11 // pred_region
          %s311 = smul.u32 2, %s36
          %s313 = ssub.s32 4096, 4096
          %314 = vsyncadd [#allocation6], %s313
          %s315 = smul.addr %s311, 64
          %s316 = scalar_lea.hbm %s1, %s315
          %s317 = sshll.u32 [#allocation5], 4
          %s318 = int_to_ptr.vmem [resolvable:$true] %s317
          %323 = dma.hbm_to_vmem [thread:$0]  %s316, 4096, %s318, [#allocation6], 128, 128, 8
        $region16: #{tpu_custom_call.1} parent=11 // pred_fallthru
          _
        // Predicated region
        $region17: #{tpu_custom_call.1} parent=11 // pred_check
          %p324 = pneg %p125
        $region18: #{tpu_custom_call.1} parent=11 // pred_check_branch
          %326 = sbr.rel (%p324) target = $region20
        $region19: #{tpu_custom_call.1} parent=11 // pred_region
          %s327 = smul.u32 2, %s36
          %s329 = ssub.s32 4096, 4096
          %330 = vsyncadd [#allocation6], %s329
          %s331 = smul.addr %s327, 64
          %s332 = scalar_lea.hbm %s2, %s331
          %s333 = sshll.u32 [#allocation7], 4
          %s334 = int_to_ptr.vmem [resolvable:$true] %s333
          %339 = dma.hbm_to_vmem [thread:$0]  %s332, 4096, %s334, [#allocation6], 128, 128, 8
        $region20: #{tpu_custom_call.1} parent=11 // pred_fallthru
          _
        // Predicated region
        $region21: #{tpu_custom_call.1} parent=11 // pred_check
          %p340 = pneg %p151
        $region22: #{tpu_custom_call.1} parent=11 // pred_check_branch
          %342 = sbr.rel (%p340) target = $region24
        $region23: #{tpu_custom_call.1} parent=11 // pred_region
          %s343 = smul.u32 2, %s36
          %s345 = ssub.s32 4096, 4096
          %346 = vsyncadd [#allocation9], %s345
          %s347 = smul.addr %s343, 64
          %s348 = scalar_lea.hbm %s3, %s347
          %s349 = sshll.u32 [#allocation8], 4
          %s350 = int_to_ptr.vmem [resolvable:$true] %s349
          %355 = dma.hbm_to_vmem [thread:$0]  %s348, 4096, %s350, [#allocation9], 128, 128, 8
        $region24: #{tpu_custom_call.1} parent=11 // pred_fallthru
          _
        // Predicated region
        $region25: #{tpu_custom_call.1} parent=11 // pred_check
          %p356 = pneg %p177
        $region26: #{tpu_custom_call.1} parent=11 // pred_check_branch
          %358 = sbr.rel (%p356) target = $region28
        $region27: #{tpu_custom_call.1} parent=11 // pred_region
          %s360 = ssub.s32 128, 128
          %361 = vsyncadd [#allocation9], %s360
          %s362 = smul.addr %s38, 128
          %s363 = scalar_lea.hbm %s4, %s362
          %s365 = sshll.u32 [#allocation10], 4
          %s366 = int_to_ptr.vmem [resolvable:$true] %s365
          %368 = dma.hbm_to_vmem [thread:$0]  %s363, 128, %s366, [#allocation9]
        $region28: #{tpu_custom_call.1} parent=11 // pred_fallthru
          _
        // Predicated region
        $region29: #{tpu_custom_call.1} parent=11 // pred_check
          %p369 = pneg %p203
        $region30: #{tpu_custom_call.1} parent=11 // pred_check_branch
          %371 = sbr.rel (%p369) target = $region32
        $region31: #{tpu_custom_call.1} parent=11 // pred_region
          %p372 = scmp.lt.s32.totalorder %s38, 0
          %s373 = scalar_select %p372, %s38, 0
          %s374 = smul.addr %s373, 8
          %s375 = scalar_lea.vmem %s5, %s374
        $region32: #{tpu_custom_call.1} parent=11 // pred_fallthru
          _
      $region12: #{tpu_custom_call.1} parent=5 // pred_fallthru
        _
      %p376 = scmp.lt.s32.totalorder %s26, 2
      // Predicated region
      $region33: #{tpu_custom_call.1} parent=5 // pred_check
        %p377 = pneg %p376
      $region34: #{tpu_custom_call.1} parent=5 // pred_check_branch
        %379 = sbr.rel (%p377) target = $region36
      $region35: #{tpu_custom_call.1} parent=5 // pred_region
        // Predicated region
        $region37: #{tpu_custom_call.1} parent=35 // pred_check
          %p380 = pneg %p67
        $region38: #{tpu_custom_call.1} parent=35 // pred_check_branch
          %382 = sbr.rel (%p380) target = $region40
        $region39: #{tpu_custom_call.1} parent=35 // pred_region
          %s383 = sand.u32 %s57, 1
          %s384 = scalar_lea.sflag [#allocation3], %s383
          %s385 = sand.u32 %s57, 1
          %s386 = smul.addr %s385, 8
          %s387 = scalar_lea.vmem [#allocation2], %s386
          %s389 = ssub.s32 128, 128
          %390 = vsyncadd %s384, %s389
          %s391 = smul.addr %s35, 2
          %s392 = smul.addr %s34, 2
          %s393 = sadd.s32 %s391, %s392
          %s394 = smul.addr %s393, 64
          %s395 = scalar_lea.hbm %s0, %s394
          %s397 = sshll.u32 %s387, 4
          %s398 = int_to_ptr.vmem [resolvable:$true] %s397
          %400 = dma.hbm_to_vmem [thread:$0]  %s395, 128, %s398, %s384
        $region40: #{tpu_custom_call.1} parent=35 // pred_fallthru
          _
      $region36: #{tpu_custom_call.1} parent=5 // pred_fallthru
        _
      %p401 = scmp.le.s32.totalorder 1, %s26
      %p402 = scmp.lt.s32.totalorder %s26, 3
      %p403 = pnand %p401, %p402
      %p404 = pneg %p403
      // Predicated region
      $region41: #{tpu_custom_call.1} parent=5 // pred_check
        _
      $region42: #{tpu_custom_call.1} parent=5 // pred_check_branch
        %406 = sbr.rel (%p403) target = $region44
      $region43: #{tpu_custom_call.1} parent=5 // pred_region
        %s407 = ssub.s32 %s26, 1
        %s408 = sand.u32 %s60, 1
        %s409 = scalar_lea.sflag [#allocation3], %s408
        %s410 = sand.u32 %s60, 1
        %s411 = smul.addr %s410, 8
        %s412 = scalar_lea.vmem [#allocation2], %s411
        // Predicated region
        $region45: #{tpu_custom_call.1} parent=43 // pred_check
          %p413 = pneg %p73
        $region46: #{tpu_custom_call.1} parent=43 // pred_check_branch
          %415 = sbr.rel (%p413) target = $region48
        $region47: #{tpu_custom_call.1} parent=43 // pred_region
          %416 = dma.done %s409, 128
        $region48: #{tpu_custom_call.1} parent=43 // pred_fallthru
          _
        // Predicated region
        $region49: #{tpu_custom_call.1} parent=43 // pred_check
          %p417 = pneg %p99
        $region50: #{tpu_custom_call.1} parent=43 // pred_check_branch
          %419 = sbr.rel (%p417) target = $region52
        $region51: #{tpu_custom_call.1} parent=43 // pred_region
          %420 = dma.done [#allocation6], 4096
        $region52: #{tpu_custom_call.1} parent=43 // pred_fallthru
          _
        // Predicated region
        $region53: #{tpu_custom_call.1} parent=43 // pred_check
          %p421 = pneg %p125
        $region54: #{tpu_custom_call.1} parent=43 // pred_check_branch
          %423 = sbr.rel (%p421) target = $region56
        $region55: #{tpu_custom_call.1} parent=43 // pred_region
          %424 = dma.done [#allocation6], 4096
        $region56: #{tpu_custom_call.1} parent=43 // pred_fallthru
          _
        // Predicated region
        $region57: #{tpu_custom_call.1} parent=43 // pred_check
          %p425 = pneg %p151
        $region58: #{tpu_custom_call.1} parent=43 // pred_check_branch
          %427 = sbr.rel (%p425) target = $region60
        $region59: #{tpu_custom_call.1} parent=43 // pred_region
          %428 = dma.done [#allocation9], 4096
        $region60: #{tpu_custom_call.1} parent=43 // pred_fallthru
          _
        // Predicated region
        $region61: #{tpu_custom_call.1} parent=43 // pred_check
          %p429 = pneg %p177
        $region62: #{tpu_custom_call.1} parent=43 // pred_check_branch
          %431 = sbr.rel (%p429) target = $region64
        $region63: #{tpu_custom_call.1} parent=43 // pred_region
          %432 = dma.done [#allocation9], 128
        $region64: #{tpu_custom_call.1} parent=43 // pred_fallthru
          _
        %s433 = sand.u32 %s60, 1
        %s434 = scalar_lea.sflag [#allocation3], %s433
        %s435 = sand.u32 %s60, 1
        %s436 = smul.addr %s435, 8
        %s437 = scalar_lea.vmem [#allocation2], %s436
        %p438 = pneg %p73
        %p439 = pneg %p70
        %p440 = pneg %p99
        %p441 = pneg %p96
        %p442 = pneg %p125
        %p443 = pneg %p122
        %p444 = pneg %p151
        %p445 = pneg %p148
        %p446 = pneg %p177
        %p447 = pneg %p174
        %p448 = scmp.lt.s32.totalorder %s38, 0
        %s449 = scalar_select %p448, %s38, 0
        %s450 = smul.addr %s449, 8
        %s451 = scalar_lea.vmem %s5, %s450
        %p452 = pneg %p203
        %p453 = pneg %p200
        %p454 = pneg %p233
        %p455 = pneg %p230
        %s456 = sand.u32 %s220, 1
        %s457 = scalar_lea.sflag [#allocation4], %s456
        %s458 = sand.u32 %s220, 1
        %s459 = smul.addr %s458, 8
        %s460 = scalar_lea.vmem [#allocation11], %s459
        %p461 = pneg %p263
        %p462 = pneg %p260
        %s463 = sand.u32 %s31, 1
        %s464 = scalar_lea.sflag [#allocation13], %s463
        %s465 = sand.u32 %s250, 1
        %s466 = smul.addr %s465, 8
        %s467 = scalar_lea.vmem [#allocation12], %s466
        %p468 = pneg %p293
        %p469 = pneg %p290
        %s470 = sand.u32 %s31, 1
        %s471 = scalar_lea.sflag [#allocation13], %s470
        %s472 = sand.u32 %s280, 1
        %s473 = smul.addr %s472, 8
        %s474 = scalar_lea.vmem [#allocation14], %s473
        %s475 = smul.u32 2, %s36
        %s476 = smul.u32 2, %s36
        %s477 = smul.u32 2, %s36
        %p478 = scmp.lt.s32.totalorder %s38, 0
        %s479 = scalar_select %p478, %s38, 0
        %s480 = smul.addr %s479, 8
        %s481 = scalar_lea.vmem %s5, %s480
        %s482 = smul.u32 2, %s36
        %s483 = smul.u32 2, %s36
        %s484 = smul.u32 2, %s36
        %v485 = vld [vmem:[%s412] sm:$0xff]
        %v486 = vld [vmem:[#allocation10] sm:$0xff]
        %v487 = vld [vmem:[%s481] sm:$0xff]
        %v488 = vld [vmem:[#allocation5] sm:$0xff]
        %v489 = vld [vmem:[#allocation5 + $0x8] sm:$0xff]
        %v490 = vld [vmem:[#allocation5 + $0x10] sm:$0xff]
        %v491 = vld [vmem:[#allocation5 + $0x18] sm:$0xff]
        %v492 = vld [vmem:[#allocation5 + $0x20] sm:$0xff]
        %v493 = vld [vmem:[#allocation5 + $0x28] sm:$0xff]
        %v494 = vld [vmem:[#allocation5 + $0x30] sm:$0xff]
        %v495 = vld [vmem:[#allocation5 + $0x38] sm:$0xff]
        %v496 = vld [vmem:[#allocation5 + $0x40] sm:$0xff]
        %v497 = vld [vmem:[#allocation5 + $0x48] sm:$0xff]
        %v498 = vld [vmem:[#allocation5 + $0x50] sm:$0xff]
        %v499 = vld [vmem:[#allocation5 + $0x58] sm:$0xff]
        %v500 = vld [vmem:[#allocation5 + $0x60] sm:$0xff]
        %v501 = vld [vmem:[#allocation5 + $0x68] sm:$0xff]
        %v502 = vld [vmem:[#allocation5 + $0x70] sm:$0xff]
        %v503 = vld [vmem:[#allocation5 + $0x78] sm:$0xff]
        %v504 = vld [vmem:[#allocation5 + $0x80] sm:$0xff]
        %v505 = vld [vmem:[#allocation5 + $0x88] sm:$0xff]
        %v506 = vld [vmem:[#allocation5 + $0x90] sm:$0xff]
        %v507 = vld [vmem:[#allocation5 + $0x98] sm:$0xff]
        %v508 = vld [vmem:[#allocation5 + $0xa0] sm:$0xff]
        %v509 = vld [vmem:[#allocation5 + $0xa8] sm:$0xff]
        %v510 = vld [vmem:[#allocation5 + $0xb0] sm:$0xff]
        %v511 = vld [vmem:[#allocation5 + $0xb8] sm:$0xff]
        %v512 = vld [vmem:[#allocation5 + $0xc0] sm:$0xff]
        %v513 = vld [vmem:[#allocation5 + $0xc8] sm:$0xff]
        %v514 = vld [vmem:[#allocation5 + $0xd0] sm:$0xff]
        %v515 = vld [vmem:[#allocation5 + $0xd8] sm:$0xff]
        %v516 = vld [vmem:[#allocation5 + $0xe0] sm:$0xff]
        %v517 = vld [vmem:[#allocation5 + $0xe8] sm:$0xff]
        %v518 = vld [vmem:[#allocation5 + $0xf0] sm:$0xff]
        %v519 = vld [vmem:[#allocation5 + $0xf8] sm:$0xff]
        %v521 = vunpack.c.l.b16 %v485
        %v522 = vunpack.c.h.b16 %v485
        %v523 = vpack.c.b16 %v521, %v521
        %v524 = vpack.c.b16 %v522, %v522
        %v559 = vunpack.c.l.b16 %v488
        %v560 = vunpack.c.h.b16 %v488
        %v561 = vunpack.c.l.b16 %v489
        %v562 = vunpack.c.h.b16 %v489
        %v563 = vunpack.c.l.b16 %v490
        %v564 = vunpack.c.h.b16 %v490
        %v565 = vunpack.c.l.b16 %v491
        %v566 = vunpack.c.h.b16 %v491
        %v567 = vunpack.c.l.b16 %v492
        %v568 = vunpack.c.h.b16 %v492
        %v569 = vunpack.c.l.b16 %v493
        %v570 = vunpack.c.h.b16 %v493
        %v571 = vunpack.c.l.b16 %v494
        %v572 = vunpack.c.h.b16 %v494
        %v573 = vunpack.c.l.b16 %v495
        %v574 = vunpack.c.h.b16 %v495
        %v575 = vunpack.c.l.b16 %v496
        %v576 = vunpack.c.h.b16 %v496
        %v577 = vunpack.c.l.b16 %v497
        %v578 = vunpack.c.h.b16 %v497
        %v579 = vunpack.c.l.b16 %v498
        %v580 = vunpack.c.h.b16 %v498
        %v581 = vunpack.c.l.b16 %v499
        %v582 = vunpack.c.h.b16 %v499
        %v583 = vunpack.c.l.b16 %v500
        %v584 = vunpack.c.h.b16 %v500
        %v585 = vunpack.c.l.b16 %v501
        %v586 = vunpack.c.h.b16 %v501
        %v587 = vunpack.c.l.b16 %v502
        %v588 = vunpack.c.h.b16 %v502
        %v589 = vunpack.c.l.b16 %v503
        %v590 = vunpack.c.h.b16 %v503
        %v591 = vunpack.c.l.b16 %v504
        %v592 = vunpack.c.h.b16 %v504
        %v593 = vunpack.c.l.b16 %v505
        %v594 = vunpack.c.h.b16 %v505
        %v595 = vunpack.c.l.b16 %v506
        %v596 = vunpack.c.h.b16 %v506
        %v597 = vunpack.c.l.b16 %v507
        %v598 = vunpack.c.h.b16 %v507
        %v599 = vunpack.c.l.b16 %v508
        %v600 = vunpack.c.h.b16 %v508
        %v601 = vunpack.c.l.b16 %v509
        %v602 = vunpack.c.h.b16 %v509
        %v603 = vunpack.c.l.b16 %v510
        %v604 = vunpack.c.h.b16 %v510
        %v605 = vunpack.c.l.b16 %v511
        %v606 = vunpack.c.h.b16 %v511
        %v607 = vunpack.c.l.b16 %v512
        %v608 = vunpack.c.h.b16 %v512
        %v609 = vunpack.c.l.b16 %v513
        %v610 = vunpack.c.h.b16 %v513
        %v611 = vunpack.c.l.b16 %v514
        %v612 = vunpack.c.h.b16 %v514
        %v613 = vunpack.c.l.b16 %v515
        %v614 = vunpack.c.h.b16 %v515
        %v615 = vunpack.c.l.b16 %v516
        %v616 = vunpack.c.h.b16 %v516
        %v617 = vunpack.c.l.b16 %v517
        %v618 = vunpack.c.h.b16 %v517
        %v619 = vunpack.c.l.b16 %v518
        %v620 = vunpack.c.h.b16 %v518
        %v621 = vunpack.c.l.b16 %v519
        %v622 = vunpack.c.h.b16 %v519
        %v623 = vpack.c.b16 %v561, %v559
        %v624 = vpack.c.b16 %v562, %v560
        %v625 = vpack.c.b16 %v565, %v563
        %v626 = vpack.c.b16 %v566, %v564
        %v627 = vpack.c.b16 %v569, %v567
        %v628 = vpack.c.b16 %v570, %v568
        %v629 = vpack.c.b16 %v573, %v571
        %v630 = vpack.c.b16 %v574, %v572
        %v631 = vpack.c.b16 %v577, %v575
        %v632 = vpack.c.b16 %v578, %v576
        %v633 = vpack.c.b16 %v581, %v579
        %v634 = vpack.c.b16 %v582, %v580
        %v635 = vpack.c.b16 %v585, %v583
        %v636 = vpack.c.b16 %v586, %v584
        %v637 = vpack.c.b16 %v589, %v587
        %v638 = vpack.c.b16 %v590, %v588
        %v639 = vpack.c.b16 %v593, %v591
        %v640 = vpack.c.b16 %v594, %v592
        %v641 = vpack.c.b16 %v597, %v595
        %v642 = vpack.c.b16 %v598, %v596
        %v643 = vpack.c.b16 %v601, %v599
        %v644 = vpack.c.b16 %v602, %v600
        %v645 = vpack.c.b16 %v605, %v603
        %v646 = vpack.c.b16 %v606, %v604
        %v647 = vpack.c.b16 %v609, %v607
        %v648 = vpack.c.b16 %v610, %v608
        %v649 = vpack.c.b16 %v613, %v611
        %v650 = vpack.c.b16 %v614, %v612
        %v651 = vpack.c.b16 %v617, %v615
        %v652 = vpack.c.b16 %v618, %v616
        %v653 = vpack.c.b16 %v621, %v619
        %v654 = vpack.c.b16 %v622, %v620
        %687 = vmatprep.subr.bf16.mxu0 %v638
        %688 = vmatpush1.bf16.msra.mxu0 %v637
        %689 = vmatprep.subr.bf16.mxu0 %v636
        %690 = vmatpush1.bf16.msra.mxu0 %v635
        %691 = vmatprep.subr.bf16.mxu0 %v634
        %692 = vmatpush1.bf16.msra.mxu0 %v633
        %693 = vmatprep.subr.bf16.mxu0 %v632
        %694 = vmatpush1.bf16.msra.mxu0 %v631
        %695 = vmatprep.subr.bf16.mxu0 %v630
        %696 = vmatpush1.bf16.msra.mxu0 %v629
        %697 = vmatprep.subr.bf16.mxu0 %v628
        %698 = vmatpush1.bf16.msra.mxu0 %v627
        %699 = vmatprep.subr.bf16.mxu0 %v626
        %700 = vmatpush1.bf16.msra.mxu0 %v625
        %701 = vmatprep.subr.bf16.mxu0 %v624
        %702 = vmatpush1.bf16.msra.mxu0 %v623
        %703 = vmatprep.subr.bf16.mxu0 %v654
        %704 = vmatpush2.bf16.msra.mxu0 %v653
        %705 = vmatprep.subr.bf16.mxu0 %v652
        %706 = vmatpush2.bf16.msra.mxu0 %v651
        %707 = vmatprep.subr.bf16.mxu0 %v650
        %708 = vmatpush2.bf16.msra.mxu0 %v649
        %709 = vmatprep.subr.bf16.mxu0 %v648
        %710 = vmatpush2.bf16.msra.mxu0 %v647
        %711 = vmatprep.subr.bf16.mxu0 %v646
        %712 = vmatpush2.bf16.msra.mxu0 %v645
        %713 = vmatprep.subr.bf16.mxu0 %v644
        %714 = vmatpush2.bf16.msra.mxu0 %v643
        %715 = vmatprep.subr.bf16.mxu0 %v642
        %716 = vmatpush2.bf16.msra.mxu0 %v641
        %717 = vmatprep.subr.bf16.mxu0 %v640
        %718 = vmatpush2.bf16.msra.mxu0 %v639
        %719 = vmatprep.mubr.bf16.mxu0 %v524
        %720 = vmatmul.mubr.bf16.gmra.mxu0 %v523
        %v721 = vpop.f32.mrf.mxu0
        %v722 = vadd.f32 0.0, %v721
        %v723 = vpop.f32.mrf.mxu0
        %v724 = vadd.f32 0.0, %v723
        %v725 = vpop.f32.mrf.mxu0
        %v726 = vpop.f32.mrf.mxu0
        %727 = vdwg.mxu0
        %v728 = vld [vmem:[#allocation7] sm:$0xff]
        %v729 = vld [vmem:[#allocation7 + $0x8] sm:$0xff]
        %v730 = vld [vmem:[#allocation7 + $0x10] sm:$0xff]
        %v731 = vld [vmem:[#allocation7 + $0x18] sm:$0xff]
        %v732 = vld [vmem:[#allocation7 + $0x20] sm:$0xff]
        %v733 = vld [vmem:[#allocation7 + $0x28] sm:$0xff]
        %v734 = vld [vmem:[#allocation7 + $0x30] sm:$0xff]
        %v735 = vld [vmem:[#allocation7 + $0x38] sm:$0xff]
        %v736 = vld [vmem:[#allocation7 + $0x40] sm:$0xff]
        %v737 = vld [vmem:[#allocation7 + $0x48] sm:$0xff]
        %v738 = vld [vmem:[#allocation7 + $0x50] sm:$0xff]
        %v739 = vld [vmem:[#allocation7 + $0x58] sm:$0xff]
        %v740 = vld [vmem:[#allocation7 + $0x60] sm:$0xff]
        %v741 = vld [vmem:[#allocation7 + $0x68] sm:$0xff]
        %v742 = vld [vmem:[#allocation7 + $0x70] sm:$0xff]
        %v743 = vld [vmem:[#allocation7 + $0x78] sm:$0xff]
        %v744 = vld [vmem:[#allocation7 + $0x80] sm:$0xff]
        %v745 = vld [vmem:[#allocation7 + $0x88] sm:$0xff]
        %v746 = vld [vmem:[#allocation7 + $0x90] sm:$0xff]
        %v747 = vld [vmem:[#allocation7 + $0x98] sm:$0xff]
        %v748 = vld [vmem:[#allocation7 + $0xa0] sm:$0xff]
        %v749 = vld [vmem:[#allocation7 + $0xa8] sm:$0xff]
        %v750 = vld [vmem:[#allocation7 + $0xb0] sm:$0xff]
        %v751 = vld [vmem:[#allocation7 + $0xb8] sm:$0xff]
        %v752 = vld [vmem:[#allocation7 + $0xc0] sm:$0xff]
        %v753 = vld [vmem:[#allocation7 + $0xc8] sm:$0xff]
        %v754 = vld [vmem:[#allocation7 + $0xd0] sm:$0xff]
        %v755 = vld [vmem:[#allocation7 + $0xd8] sm:$0xff]
        %v756 = vld [vmem:[#allocation7 + $0xe0] sm:$0xff]
        %v757 = vld [vmem:[#allocation7 + $0xe8] sm:$0xff]
        %v758 = vld [vmem:[#allocation7 + $0xf0] sm:$0xff]
        %v759 = vld [vmem:[#allocation7 + $0xf8] sm:$0xff]
        %v792 = vunpack.c.l.b16 %v728
        %v793 = vunpack.c.h.b16 %v728
        %v794 = vunpack.c.l.b16 %v729
        %v795 = vunpack.c.h.b16 %v729
        %v796 = vunpack.c.l.b16 %v730
        %v797 = vunpack.c.h.b16 %v730
        %v798 = vunpack.c.l.b16 %v731
        %v799 = vunpack.c.h.b16 %v731
        %v800 = vunpack.c.l.b16 %v732
        %v801 = vunpack.c.h.b16 %v732
        %v802 = vunpack.c.l.b16 %v733
        %v803 = vunpack.c.h.b16 %v733
        %v804 = vunpack.c.l.b16 %v734
        %v805 = vunpack.c.h.b16 %v734
        %v806 = vunpack.c.l.b16 %v735
        %v807 = vunpack.c.h.b16 %v735
        %v808 = vunpack.c.l.b16 %v736
        %v809 = vunpack.c.h.b16 %v736
        %v810 = vunpack.c.l.b16 %v737
        %v811 = vunpack.c.h.b16 %v737
        %v812 = vunpack.c.l.b16 %v738
        %v813 = vunpack.c.h.b16 %v738
        %v814 = vunpack.c.l.b16 %v739
        %v815 = vunpack.c.h.b16 %v739
        %v816 = vunpack.c.l.b16 %v740
        %v817 = vunpack.c.h.b16 %v740
        %v818 = vunpack.c.l.b16 %v741
        %v819 = vunpack.c.h.b16 %v741
        %v820 = vunpack.c.l.b16 %v742
        %v821 = vunpack.c.h.b16 %v742
        %v822 = vunpack.c.l.b16 %v743
        %v823 = vunpack.c.h.b16 %v743
        %v824 = vunpack.c.l.b16 %v744
        %v825 = vunpack.c.h.b16 %v744
        %v826 = vunpack.c.l.b16 %v745
        %v827 = vunpack.c.h.b16 %v745
        %v828 = vunpack.c.l.b16 %v746
        %v829 = vunpack.c.h.b16 %v746
        %v830 = vunpack.c.l.b16 %v747
        %v831 = vunpack.c.h.b16 %v747
        %v832 = vunpack.c.l.b16 %v748
        %v833 = vunpack.c.h.b16 %v748
        %v834 = vunpack.c.l.b16 %v749
        %v835 = vunpack.c.h.b16 %v749
        %v836 = vunpack.c.l.b16 %v750
        %v837 = vunpack.c.h.b16 %v750
        %v838 = vunpack.c.l.b16 %v751
        %v839 = vunpack.c.h.b16 %v751
        %v840 = vunpack.c.l.b16 %v752
        %v841 = vunpack.c.h.b16 %v752
        %v842 = vunpack.c.l.b16 %v753
        %v843 = vunpack.c.h.b16 %v753
        %v844 = vunpack.c.l.b16 %v754
        %v845 = vunpack.c.h.b16 %v754
        %v846 = vunpack.c.l.b16 %v755
        %v847 = vunpack.c.h.b16 %v755
        %v848 = vunpack.c.l.b16 %v756
        %v849 = vunpack.c.h.b16 %v756
        %v850 = vunpack.c.l.b16 %v757
        %v851 = vunpack.c.h.b16 %v757
        %v852 = vunpack.c.l.b16 %v758
        %v853 = vunpack.c.h.b16 %v758
        %v854 = vunpack.c.l.b16 %v759
        %v855 = vunpack.c.h.b16 %v759
        %v856 = vpack.c.b16 %v794, %v792
        %v857 = vpack.c.b16 %v795, %v793
        %v858 = vpack.c.b16 %v798, %v796
        %v859 = vpack.c.b16 %v799, %v797
        %v860 = vpack.c.b16 %v802, %v800
        %v861 = vpack.c.b16 %v803, %v801
        %v862 = vpack.c.b16 %v806, %v804
        %v863 = vpack.c.b16 %v807, %v805
        %v864 = vpack.c.b16 %v810, %v808
        %v865 = vpack.c.b16 %v811, %v809
        %v866 = vpack.c.b16 %v814, %v812
        %v867 = vpack.c.b16 %v815, %v813
        %v868 = vpack.c.b16 %v818, %v816
        %v869 = vpack.c.b16 %v819, %v817
        %v870 = vpack.c.b16 %v822, %v820
        %v871 = vpack.c.b16 %v823, %v821
        %v872 = vpack.c.b16 %v826, %v824
        %v873 = vpack.c.b16 %v827, %v825
        %v874 = vpack.c.b16 %v830, %v828
        %v875 = vpack.c.b16 %v831, %v829
        %v876 = vpack.c.b16 %v834, %v832
        %v877 = vpack.c.b16 %v835, %v833
        %v878 = vpack.c.b16 %v838, %v836
        %v879 = vpack.c.b16 %v839, %v837
        %v880 = vpack.c.b16 %v842, %v840
        %v881 = vpack.c.b16 %v843, %v841
        %v882 = vpack.c.b16 %v846, %v844
        %v883 = vpack.c.b16 %v847, %v845
        %v884 = vpack.c.b16 %v850, %v848
        %v885 = vpack.c.b16 %v851, %v849
        %v886 = vpack.c.b16 %v854, %v852
        %v887 = vpack.c.b16 %v855, %v853
        %920 = vmatprep.subr.bf16.mxu0 %v871
        %921 = vmatpush1.bf16.msra.mxu0 %v870
        %922 = vmatprep.subr.bf16.mxu0 %v869
        %923 = vmatpush1.bf16.msra.mxu0 %v868
        %924 = vmatprep.subr.bf16.mxu0 %v867
        %925 = vmatpush1.bf16.msra.mxu0 %v866
        %926 = vmatprep.subr.bf16.mxu0 %v865
        %927 = vmatpush1.bf16.msra.mxu0 %v864
        %928 = vmatprep.subr.bf16.mxu0 %v863
        %929 = vmatpush1.bf16.msra.mxu0 %v862
        %930 = vmatprep.subr.bf16.mxu0 %v861
        %931 = vmatpush1.bf16.msra.mxu0 %v860
        %932 = vmatprep.subr.bf16.mxu0 %v859
        %933 = vmatpush1.bf16.msra.mxu0 %v858
        %934 = vmatprep.subr.bf16.mxu0 %v857
        %935 = vmatpush1.bf16.msra.mxu0 %v856
        %936 = vmatprep.subr.bf16.mxu0 %v887
        %937 = vmatpush2.bf16.msra.mxu0 %v886
        %938 = vmatprep.subr.bf16.mxu0 %v885
        %939 = vmatpush2.bf16.msra.mxu0 %v884
        %940 = vmatprep.subr.bf16.mxu0 %v883
        %941 = vmatpush2.bf16.msra.mxu0 %v882
        %942 = vmatprep.subr.bf16.mxu0 %v881
        %943 = vmatpush2.bf16.msra.mxu0 %v880
        %944 = vmatprep.subr.bf16.mxu0 %v879
        %945 = vmatpush2.bf16.msra.mxu0 %v878
        %946 = vmatprep.subr.bf16.mxu0 %v877
        %947 = vmatpush2.bf16.msra.mxu0 %v876
        %948 = vmatprep.subr.bf16.mxu0 %v875
        %949 = vmatpush2.bf16.msra.mxu0 %v874
        %950 = vmatprep.subr.bf16.mxu0 %v873
        %951 = vmatpush2.bf16.msra.mxu0 %v872
        %952 = vmatprep.mubr.bf16.mxu0 %v524
        %953 = vmatmul.mubr.bf16.gmra.mxu0 %v523
        %v954 = vpop.f32.mrf.mxu0
        %v955 = vadd.f32 0.0, %v954
        %v956 = vpop.f32.mrf.mxu0
        %v957 = vadd.f32 0.0, %v956
        %v958 = vpop.f32.mrf.mxu0
        %v959 = vpop.f32.mrf.mxu0
        %960 = vdwg.mxu0
        %v961 = vld [vmem:[#allocation8] sm:$0xff]
        %v962 = vld [vmem:[#allocation8 + $0x8] sm:$0xff]
        %v963 = vld [vmem:[#allocation8 + $0x10] sm:$0xff]
        %v964 = vld [vmem:[#allocation8 + $0x18] sm:$0xff]
        %v965 = vld [vmem:[#allocation8 + $0x20] sm:$0xff]
        %v966 = vld [vmem:[#allocation8 + $0x28] sm:$0xff]
        %v967 = vld [vmem:[#allocation8 + $0x30] sm:$0xff]
        %v968 = vld [vmem:[#allocation8 + $0x38] sm:$0xff]
        %v969 = vld [vmem:[#allocation8 + $0x40] sm:$0xff]
        %v970 = vld [vmem:[#allocation8 + $0x48] sm:$0xff]
        %v971 = vld [vmem:[#allocation8 + $0x50] sm:$0xff]
        %v972 = vld [vmem:[#allocation8 + $0x58] sm:$0xff]
        %v973 = vld [vmem:[#allocation8 + $0x60] sm:$0xff]
        %v974 = vld [vmem:[#allocation8 + $0x68] sm:$0xff]
        %v975 = vld [vmem:[#allocation8 + $0x70] sm:$0xff]
        %v976 = vld [vmem:[#allocation8 + $0x78] sm:$0xff]
        %v977 = vld [vmem:[#allocation8 + $0x80] sm:$0xff]
        %v978 = vld [vmem:[#allocation8 + $0x88] sm:$0xff]
        %v979 = vld [vmem:[#allocation8 + $0x90] sm:$0xff]
        %v980 = vld [vmem:[#allocation8 + $0x98] sm:$0xff]
        %v981 = vld [vmem:[#allocation8 + $0xa0] sm:$0xff]
        %v982 = vld [vmem:[#allocation8 + $0xa8] sm:$0xff]
        %v983 = vld [vmem:[#allocation8 + $0xb0] sm:$0xff]
        %v984 = vld [vmem:[#allocation8 + $0xb8] sm:$0xff]
        %v985 = vld [vmem:[#allocation8 + $0xc0] sm:$0xff]
        %v986 = vld [vmem:[#allocation8 + $0xc8] sm:$0xff]
        %v987 = vld [vmem:[#allocation8 + $0xd0] sm:$0xff]
        %v988 = vld [vmem:[#allocation8 + $0xd8] sm:$0xff]
        %v989 = vld [vmem:[#allocation8 + $0xe0] sm:$0xff]
        %v990 = vld [vmem:[#allocation8 + $0xe8] sm:$0xff]
        %v991 = vld [vmem:[#allocation8 + $0xf0] sm:$0xff]
        %v992 = vld [vmem:[#allocation8 + $0xf8] sm:$0xff]
        %v1025 = vunpack.c.l.b16 %v961
        %v1026 = vunpack.c.h.b16 %v961
        %v1027 = vunpack.c.l.b16 %v962
        %v1028 = vunpack.c.h.b16 %v962
        %v1029 = vunpack.c.l.b16 %v963
        %v1030 = vunpack.c.h.b16 %v963
        %v1031 = vunpack.c.l.b16 %v964
        %v1032 = vunpack.c.h.b16 %v964
        %v1033 = vunpack.c.l.b16 %v965
        %v1034 = vunpack.c.h.b16 %v965
        %v1035 = vunpack.c.l.b16 %v966
        %v1036 = vunpack.c.h.b16 %v966
        %v1037 = vunpack.c.l.b16 %v967
        %v1038 = vunpack.c.h.b16 %v967
        %v1039 = vunpack.c.l.b16 %v968
        %v1040 = vunpack.c.h.b16 %v968
        %v1041 = vunpack.c.l.b16 %v969
        %v1042 = vunpack.c.h.b16 %v969
        %v1043 = vunpack.c.l.b16 %v970
        %v1044 = vunpack.c.h.b16 %v970
        %v1045 = vunpack.c.l.b16 %v971
        %v1046 = vunpack.c.h.b16 %v971
        %v1047 = vunpack.c.l.b16 %v972
        %v1048 = vunpack.c.h.b16 %v972
        %v1049 = vunpack.c.l.b16 %v973
        %v1050 = vunpack.c.h.b16 %v973
        %v1051 = vunpack.c.l.b16 %v974
        %v1052 = vunpack.c.h.b16 %v974
        %v1053 = vunpack.c.l.b16 %v975
        %v1054 = vunpack.c.h.b16 %v975
        %v1055 = vunpack.c.l.b16 %v976
        %v1056 = vunpack.c.h.b16 %v976
        %v1057 = vunpack.c.l.b16 %v977
        %v1058 = vunpack.c.h.b16 %v977
        %v1059 = vunpack.c.l.b16 %v978
        %v1060 = vunpack.c.h.b16 %v978
        %v1061 = vunpack.c.l.b16 %v979
        %v1062 = vunpack.c.h.b16 %v979
        %v1063 = vunpack.c.l.b16 %v980
        %v1064 = vunpack.c.h.b16 %v980
        %v1065 = vunpack.c.l.b16 %v981
        %v1066 = vunpack.c.h.b16 %v981
        %v1067 = vunpack.c.l.b16 %v982
        %v1068 = vunpack.c.h.b16 %v982
        %v1069 = vunpack.c.l.b16 %v983
        %v1070 = vunpack.c.h.b16 %v983
        %v1071 = vunpack.c.l.b16 %v984
        %v1072 = vunpack.c.h.b16 %v984
        %v1073 = vunpack.c.l.b16 %v985
        %v1074 = vunpack.c.h.b16 %v985
        %v1075 = vunpack.c.l.b16 %v986
        %v1076 = vunpack.c.h.b16 %v986
        %v1077 = vunpack.c.l.b16 %v987
        %v1078 = vunpack.c.h.b16 %v987
        %v1079 = vunpack.c.l.b16 %v988
        %v1080 = vunpack.c.h.b16 %v988
        %v1081 = vunpack.c.l.b16 %v989
        %v1082 = vunpack.c.h.b16 %v989
        %v1083 = vunpack.c.l.b16 %v990
        %v1084 = vunpack.c.h.b16 %v990
        %v1085 = vunpack.c.l.b16 %v991
        %v1086 = vunpack.c.h.b16 %v991
        %v1087 = vunpack.c.l.b16 %v992
        %v1088 = vunpack.c.h.b16 %v992
        %v1089 = vpack.c.b16 %v1027, %v1025
        %v1090 = vpack.c.b16 %v1028, %v1026
        %v1091 = vpack.c.b16 %v1031, %v1029
        %v1092 = vpack.c.b16 %v1032, %v1030
        %v1093 = vpack.c.b16 %v1035, %v1033
        %v1094 = vpack.c.b16 %v1036, %v1034
        %v1095 = vpack.c.b16 %v1039, %v1037
        %v1096 = vpack.c.b16 %v1040, %v1038
        %v1097 = vpack.c.b16 %v1043, %v1041
        %v1098 = vpack.c.b16 %v1044, %v1042
        %v1099 = vpack.c.b16 %v1047, %v1045
        %v1100 = vpack.c.b16 %v1048, %v1046
        %v1101 = vpack.c.b16 %v1051, %v1049
        %v1102 = vpack.c.b16 %v1052, %v1050
        %v1103 = vpack.c.b16 %v1055, %v1053
        %v1104 = vpack.c.b16 %v1056, %v1054
        %v1105 = vpack.c.b16 %v1059, %v1057
        %v1106 = vpack.c.b16 %v1060, %v1058
        %v1107 = vpack.c.b16 %v1063, %v1061
        %v1108 = vpack.c.b16 %v1064, %v1062
        %v1109 = vpack.c.b16 %v1067, %v1065
        %v1110 = vpack.c.b16 %v1068, %v1066
        %v1111 = vpack.c.b16 %v1071, %v1069
        %v1112 = vpack.c.b16 %v1072, %v1070
        %v1113 = vpack.c.b16 %v1075, %v1073
        %v1114 = vpack.c.b16 %v1076, %v1074
        %v1115 = vpack.c.b16 %v1079, %v1077
        %v1116 = vpack.c.b16 %v1080, %v1078
        %v1117 = vpack.c.b16 %v1083, %v1081
        %v1118 = vpack.c.b16 %v1084, %v1082
        %v1119 = vpack.c.b16 %v1087, %v1085
        %v1120 = vpack.c.b16 %v1088, %v1086
        %1153 = vmatprep.subr.bf16.mxu0 %v1104
        %1154 = vmatpush1.bf16.msra.mxu0 %v1103
        %1155 = vmatprep.subr.bf16.mxu0 %v1102
        %1156 = vmatpush1.bf16.msra.mxu0 %v1101
        %1157 = vmatprep.subr.bf16.mxu0 %v1100
        %1158 = vmatpush1.bf16.msra.mxu0 %v1099
        %1159 = vmatprep.subr.bf16.mxu0 %v1098
        %1160 = vmatpush1.bf16.msra.mxu0 %v1097
        %1161 = vmatprep.subr.bf16.mxu0 %v1096
        %1162 = vmatpush1.bf16.msra.mxu0 %v1095
        %1163 = vmatprep.subr.bf16.mxu0 %v1094
        %1164 = vmatpush1.bf16.msra.mxu0 %v1093
        %1165 = vmatprep.subr.bf16.mxu0 %v1092
        %1166 = vmatpush1.bf16.msra.mxu0 %v1091
        %1167 = vmatprep.subr.bf16.mxu0 %v1090
        %1168 = vmatpush1.bf16.msra.mxu0 %v1089
        %1169 = vmatprep.subr.bf16.mxu0 %v1120
        %1170 = vmatpush2.bf16.msra.mxu0 %v1119
        %1171 = vmatprep.subr.bf16.mxu0 %v1118
        %1172 = vmatpush2.bf16.msra.mxu0 %v1117
        %1173 = vmatprep.subr.bf16.mxu0 %v1116
        %1174 = vmatpush2.bf16.msra.mxu0 %v1115
        %1175 = vmatprep.subr.bf16.mxu0 %v1114
        %1176 = vmatpush2.bf16.msra.mxu0 %v1113
        %1177 = vmatprep.subr.bf16.mxu0 %v1112
        %1178 = vmatpush2.bf16.msra.mxu0 %v1111
        %1179 = vmatprep.subr.bf16.mxu0 %v1110
        %1180 = vmatpush2.bf16.msra.mxu0 %v1109
        %1181 = vmatprep.subr.bf16.mxu0 %v1108
        %1182 = vmatpush2.bf16.msra.mxu0 %v1107
        %1183 = vmatprep.subr.bf16.mxu0 %v1106
        %1184 = vmatpush2.bf16.msra.mxu0 %v1105
        %1185 = vmatprep.mubr.bf16.mxu0 %v524
        %1186 = vmatmul.mubr.bf16.gmra.mxu0 %v523
        %v1187 = vpop.f32.mrf.mxu0
        %v1188 = vadd.f32 0.0, %v1187
        %v1189 = vpop.f32.mrf.mxu0
        %v1190 = vadd.f32 0.0, %v1189
        %v1191 = vpop.f32.mrf.mxu0
        %v1192 = vpop.f32.mrf.mxu0
        %1193 = vdwg.mxu0
        %v1194 = vmul.f32 %v722, %v486
        %1195 = vrot.lane.b32.xlu0 %v722, 64
        %v1196 = vpop.permute.xlu0 %1195
        %v1197 = vmul.f32 %v1196, %v487
        %v1198 = vadd.f32 %v1194, %v1197
        %v1199 = vmul.f32 %v724, %v486
        %1200 = vrot.lane.b32.xlu0 %v724, 64
        %v1201 = vpop.permute.xlu0 %1200
        %v1202 = vmul.f32 %v1201, %v487
        %v1203 = vadd.f32 %v1199, %v1202
        %v1204 = vpack.c.bf16 %v1198, %v1198
        %v1205 = vpack.c.bf16 %v1203, %v1203
        %v1208 = vunpack.c.l.b16 %v1204
        %v1209 = vunpack.c.l.b16 %v1205
        %v1210 = vpack.c.b16 %v1209, %v1208
        %1212 = vst [vmem:[%s460] sm:$0xff] %v1210
        %v1213 = vmul.f32 %v955, %v486
        %1214 = vrot.lane.b32.xlu0 %v955, 64
        %v1215 = vpop.permute.xlu0 %1214
        %v1216 = vmul.f32 %v1215, %v487
        %v1217 = vadd.f32 %v1213, %v1216
        %v1218 = vmul.f32 %v957, %v486
        %1219 = vrot.lane.b32.xlu0 %v957, 64
        %v1220 = vpop.permute.xlu0 %1219
        %v1221 = vmul.f32 %v1220, %v487
        %v1222 = vadd.f32 %v1218, %v1221
        %v1223 = vpack.c.bf16 %v1217, %v1217
        %v1224 = vpack.c.bf16 %v1222, %v1222
        %v1227 = vunpack.c.l.b16 %v1223
        %v1228 = vunpack.c.l.b16 %v1224
        %v1229 = vpack.c.b16 %v1228, %v1227
        %1231 = vst [vmem:[%s467] sm:$0xff] %v1229
        %v1232 = vpack.c.bf16 %v1188, %v1188
        %v1233 = vpack.c.bf16 %v1190, %v1190
        %v1236 = vunpack.c.l.b16 %v1232
        %v1237 = vunpack.c.l.b16 %v1233
        %v1238 = vpack.c.b16 %v1237, %v1236
        %1240 = vst [vmem:[%s474] sm:$0xff] %v1238
        %s1241 = sand.u32 %s220, 1
        %s1242 = scalar_lea.sflag [#allocation4], %s1241
        %s1243 = sand.u32 %s220, 1
        %s1244 = smul.addr %s1243, 8
        %s1245 = scalar_lea.vmem [#allocation11], %s1244
        %s1246 = sand.u32 %s31, 1
        %s1247 = scalar_lea.sflag [#allocation13], %s1246
        %s1248 = sand.u32 %s250, 1
        %s1249 = smul.addr %s1248, 8
        %s1250 = scalar_lea.vmem [#allocation12], %s1249
        %s1251 = sand.u32 %s31, 1
        %s1252 = scalar_lea.sflag [#allocation13], %s1251
        %s1253 = sand.u32 %s280, 1
        %s1254 = smul.addr %s1253, 8
        %s1255 = scalar_lea.vmem [#allocation14], %s1254
        // Predicated region
        $region65: #{tpu_custom_call.1} parent=43 // pred_check
          %p1256 = pneg %p230
        $region66: #{tpu_custom_call.1} parent=43 // pred_check_branch
          %1258 = sbr.rel (%p1256) target = $region68
        $region67: #{tpu_custom_call.1} parent=43 // pred_region
          %s1259 = smul.u32 2, %s36
          %s1261 = ssub.s32 128, 128
          %1262 = vsyncadd %s1242, %s1261
          %s1263 = smul.addr %s38, 2
          %s1264 = sadd.s32 %s1259, %s1263
          %s1265 = smul.addr %s37, 2
          %s1266 = sadd.s32 %s1264, %s1265
          %s1267 = smul.addr %s1266, 64
          %s1268 = scalar_lea.hbm %s6, %s1267
          %s1270 = sshll.u32 %s1245, 4
          %s1271 = int_to_ptr.vmem [resolvable:$true] %s1270
          %1273 = dma.vmem_to_hbm [thread:$0]  %s1271, 128, %s1268, %s1242
        $region68: #{tpu_custom_call.1} parent=43 // pred_fallthru
          _
        // Predicated region
        $region69: #{tpu_custom_call.1} parent=43 // pred_check
          %p1274 = pneg %p260
        $region70: #{tpu_custom_call.1} parent=43 // pred_check_branch
          %1276 = sbr.rel (%p1274) target = $region72
        $region71: #{tpu_custom_call.1} parent=43 // pred_region
          %s1277 = smul.u32 2, %s36
          %s1279 = ssub.s32 128, 128
          %1280 = vsyncadd %s1247, %s1279
          %s1281 = smul.addr %s38, 2
          %s1282 = sadd.s32 %s1277, %s1281
          %s1283 = smul.addr %s37, 2
          %s1284 = sadd.s32 %s1282, %s1283
          %s1285 = smul.addr %s1284, 64
          %s1286 = scalar_lea.hbm %s7, %s1285
          %s1288 = sshll.u32 %s1250, 4
          %s1289 = int_to_ptr.vmem [resolvable:$true] %s1288
          %1291 = dma.vmem_to_hbm [thread:$0]  %s1289, 128, %s1286, %s1247
        $region72: #{tpu_custom_call.1} parent=43 // pred_fallthru
          _
        // Predicated region
        $region73: #{tpu_custom_call.1} parent=43 // pred_check
          %p1292 = pneg %p290
        $region74: #{tpu_custom_call.1} parent=43 // pred_check_branch
          %1294 = sbr.rel (%p1292) target = $region76
        $region75: #{tpu_custom_call.1} parent=43 // pred_region
          %s1295 = smul.u32 2, %s36
          %s1297 = ssub.s32 128, 128
          %1298 = vsyncadd %s1252, %s1297
          %s1299 = smul.addr %s38, 2
          %s1300 = sadd.s32 %s1295, %s1299
          %s1301 = smul.addr %s37, 2
          %s1302 = sadd.s32 %s1300, %s1301
          %s1303 = smul.addr %s1302, 64
          %s1304 = scalar_lea.hbm %s8, %s1303
          %s1306 = sshll.u32 %s1255, 4
          %s1307 = int_to_ptr.vmem [resolvable:$true] %s1306
          %1309 = dma.vmem_to_hbm [thread:$0]  %s1307, 128, %s1304, %s1252
        $region76: #{tpu_custom_call.1} parent=43 // pred_fallthru
          _
      $region44: #{tpu_custom_call.1} parent=5 // pred_fallthru
        _
      %p1310 = scmp.le.s32.totalorder 2, %s26
      // Predicated region
      $region77: #{tpu_custom_call.1} parent=5 // pred_check
        %p1311 = pneg %p1310
      $region78: #{tpu_custom_call.1} parent=5 // pred_check_branch
        %1313 = sbr.rel (%p1311) target = $region80
      $region79: #{tpu_custom_call.1} parent=5 // pred_region
        %s1314 = ssub.s32 %s26, 2
        // Predicated region
        $region81: #{tpu_custom_call.1} parent=79 // pred_check
          %p1315 = pneg %p236
        $region82: #{tpu_custom_call.1} parent=79 // pred_check_branch
          %1317 = sbr.rel (%p1315) target = $region84
        $region83: #{tpu_custom_call.1} parent=79 // pred_region
          %s1318 = sand.u32 %s221, 1
          %s1319 = scalar_lea.sflag [#allocation4], %s1318
          %s1320 = sand.u32 %s221, 1
          %s1321 = smul.addr %s1320, 8
          %s1322 = scalar_lea.vmem [#allocation11], %s1321
          %1323 = dma.done %s1319, 128
        $region84: #{tpu_custom_call.1} parent=79 // pred_fallthru
          _
        // Predicated region
        $region85: #{tpu_custom_call.1} parent=79 // pred_check
          %p1324 = pneg %p266
        $region86: #{tpu_custom_call.1} parent=79 // pred_check_branch
          %1326 = sbr.rel (%p1324) target = $region88
        $region87: #{tpu_custom_call.1} parent=79 // pred_region
          %s1327 = sand.u32 %s32, 1
          %s1328 = scalar_lea.sflag [#allocation13], %s1327
          %s1329 = sand.u32 %s251, 1
          %s1330 = smul.addr %s1329, 8
          %s1331 = scalar_lea.vmem [#allocation12], %s1330
          %1332 = dma.done %s1328, 128
        $region88: #{tpu_custom_call.1} parent=79 // pred_fallthru
          _
        // Predicated region
        $region89: #{tpu_custom_call.1} parent=79 // pred_check
          %p1333 = pneg %p296
        $region90: #{tpu_custom_call.1} parent=79 // pred_check_branch
          %1335 = sbr.rel (%p1333) target = $region92
        $region91: #{tpu_custom_call.1} parent=79 // pred_region
          %s1336 = sand.u32 %s32, 1
          %s1337 = scalar_lea.sflag [#allocation13], %s1336
          %s1338 = sand.u32 %s281, 1
          %s1339 = smul.addr %s1338, 8
          %s1340 = scalar_lea.vmem [#allocation14], %s1339
          %1341 = dma.done %s1337, 128
        $region92: #{tpu_custom_call.1} parent=79 // pred_fallthru
          _
      $region80: #{tpu_custom_call.1} parent=5 // pred_fallthru
        _
    $region6: #{tpu_custom_call.1} parent=1 // loop_footer
      %s30 = sadd.s32 1, %s26
    $region7: #{tpu_custom_call.1} parent=1 // loop_footer_branch
      %25 = sbr.rel target = $region3
    $region8: #{tpu_custom_call.1} parent=1 // loop_exit
      _
    %1342 = vsyncpa [#allocation3], 1
    %s1343 = scalar_lea.sflag [#allocation3], 1
    %1344 = vsyncpa %s1343, 1
    %1345 = vsyncpa [#allocation6], 1
    %1346 = vsyncpa [#allocation9], 1
    %1347 = vsyncpa [#allocation4], 1
    %s1348 = scalar_lea.sflag [#allocation4], 1
    %1349 = vsyncpa %s1348, 1
    %1350 = vsyncpa [#allocation13], 1
    %s1351 = scalar_lea.sflag [#allocation13], 1
    %1352 = vsyncpa %s1351, 1

</llo_original>
